<compile_context>
chip_gen: v6e
topology: v6e:2x2x1
jax: 0.10.0
libtpu: 0.0.40
codegen_flags: <defaults>
</compile_context>

<pallas_src>
import functools

import numpy as np
import jax
import jax.numpy as jnp
from jax.experimental import pallas as pl
from jax.experimental.pallas import tpu as pltpu


# --------------------------------------------------------------------------- #
# Host-side helper: conv weights folded into the zero-padding validity masks.
#   wmask[dj, 2*di + m, p] = conv_w[0, m, di, dj] * valid(di, dj, p)
# on the flattened (H*W,) spatial layout; rows 2*ksize..15 are zero so the
# packed buffer can use a full (16, HW) sublane tile.
# --------------------------------------------------------------------------- #
def _build_weighted_masks(conv_w, H, W, ksize):
    assert 2 * ksize <= 16, "sublane packing assumes ksize <= 8"
    pad = ksize // 2
    rows = np.arange(H)[:, None]
    cols = np.arange(W)[None, :]
    valid = np.zeros((ksize, ksize, H * W), np.float32)
    for di in range(ksize):
        for dj in range(ksize):
            ok = ((rows + di - pad >= 0) & (rows + di - pad < H) &
                  (cols + dj - pad >= 0) & (cols + dj - pad < W))
            valid[di, dj] = ok.reshape(-1)
    valid = jnp.asarray(valid)                                   # (k, k, HW)
    w = conv_w.reshape(2, ksize, ksize).astype(jnp.float32)      # (m, di, dj)
    wm = w[:, :, :, None] * valid[None, :, :, :]                 # (m, di, dj, HW)
    wm = jnp.transpose(wm, (2, 1, 0, 3))                         # (dj, di, m, HW)
    wm = wm.reshape(ksize, 2 * ksize, H * W)                     # (dj, 2*di+m, HW)
    wm = jnp.pad(wm, ((0, 0), (0, 16 - 2 * ksize), (0, 0)))      # pad rows -> 16
    return wm


# --------------------------------------------------------------------------- #
# Fused CBAM kernel: one grid step = one batch element, block = (1, C, H*W).
# --------------------------------------------------------------------------- #
def cbam_kernel(x_ref, w1_ref, w2_ref, wmask_ref, bias_ref, o_ref, pk_ref,
                *, ksize, H, W):
    HW = H * W
    pad = ksize // 2
    x = x_ref[0]                                        # (C, HW), lane-dense f32

    # ---- channel attention: global avg/max pool -> shared MLP -> sigmoid ----
    avg_c = jnp.mean(x, axis=1, keepdims=True)          # (C, 1)
    max_c = jnp.max(x, axis=1, keepdims=True)           # (C, 1)
    w1 = w1_ref[...]
    w2 = w2_ref[...]
    # Two skinny (C,1) dots summed after the shared MLP (no lane concatenate).
    h_a = jnp.maximum(jnp.dot(w1, avg_c, preferred_element_type=jnp.float32), 0.0)
    h_m = jnp.maximum(jnp.dot(w1, max_c, preferred_element_type=jnp.float32), 0.0)
    z = (jnp.dot(w2, h_a, preferred_element_type=jnp.float32) +
         jnp.dot(w2, h_m, preferred_element_type=jnp.float32))   # (C, 1)
    ch = jax.nn.sigmoid(z)
    x1 = x * ch                                          # channel_att(x) * x

    # ---- spatial attention on flat maps ----
    sa = jnp.mean(x1, axis=0, keepdims=True)             # (1, HW) avg over channels
    sm = jnp.max(x1, axis=0, keepdims=True)              # (1, HW) max over channels
    maps = jnp.concatenate([sa, sm], axis=0)             # (2, HW): one roll serves both

    # Pack the ksize row-shifted copies of (avg, max) into the sublanes of a
    # (16, HW) scratch: row 2*di+0 = avg shifted by (di-pad)*W, row 2*di+1 = max.
    pk_ref[...] = jnp.zeros_like(pk_ref)                 # zero unused pad rows
    for di in range(ksize):
        rshift = ((pad - di) * W) % HW                   # roll by -(di-pad)*W
        rolled = pltpu.roll(maps, rshift, axis=1) if rshift else maps
        pk_ref[pl.ds(2 * di, 2), :] = rolled
    packed = pk_ref[...]                                  # (16, HW)

    # One lane-roll per column offset shifts all 14 row-copies at once; the
    # per-tap conv weights AND the zero-pad masks are pre-folded into wmask,
    # so the inner body is a single fused multiply-add on full (8,128) vregs.
    acc = jnp.zeros((16, HW), jnp.float32)
    for dj in range(ksize):
        cshift = (pad - dj) % HW                          # roll by -(dj-pad)
        shifted = pltpu.roll(packed, cshift, axis=1) if cshift else packed
        acc = acc + shifted * wmask_ref[dj]
    conv = jnp.sum(acc, axis=0, keepdims=True) + bias_ref[0]   # (1, HW)
    attn = jax.nn.sigmoid(conv)

    # CBAM.forward quirk: out = spatial_att(x1) * x1 = (x1 * attn) * x1
    o_ref[0] = x1 * attn * x1


# --------------------------------------------------------------------------- #
# Wrapper
# --------------------------------------------------------------------------- #
def cbam_forward(x, w1, w2, conv_w, conv_b, *, ksize=7):
    # TODO(synk): for very large C*H*W (per-batch slab no longer fits v7x's 64 MiB
    # VMEM) or H*W not a multiple of 128, tile H into bands with a (ksize//2)-row
    # halo and a two-pass channel pool; not needed at these shapes.
    B, C, H, W = x.shape
    Cr = w1.shape[0]
    HW = H * W

    x_flat = x.reshape(B, C, HW).astype(jnp.float32)      # contiguous NCHW -> free
    wmask = _build_weighted_masks(conv_w, H, W, ksize)    # (k, 16, HW) weighted masks
    bias = conv_b.reshape(1).astype(jnp.float32)          # only the bias stays in SMEM

    # VMEM limit derived from the actual block footprint (v7x has only 64 MiB physical):
    # in + out blocks double-buffered, plus invariant weights/masks/scratch + headroom.
    f32 = 4
    block_bytes = C * HW * f32
    aux_bytes = (int(wmask.size) + int(w1.size) + int(w2.size) + 16 * HW) * f32
    vmem_limit = int(min(48 << 20,
                         max(8 << 20, 4 * block_bytes + 2 * aux_bytes + (4 << 20))))

    # TODO(synk): if the surrounding model tolerates bf16 activations, stream x/out as
    # bfloat16 (halves HBM traffic of this memory-bound kernel); kept f32 to match the
    # PyTorch module exactly.
    # TODO(synk): on single-TensorCore v5e/v6e with tiny B, folding the batch into one
    # (B, C, HW) block removes the 2-step pipeline overhead; grid=(B,) is kept so
    # v7x's two TensorCores each take one batch element.
    out = pl.pallas_call(
        functools.partial(cbam_kernel, ksize=ksize, H=H, W=W),
        out_shape=jax.ShapeDtypeStruct((B, C, HW), jnp.float32),
        grid=(B,),
        in_specs=[
            pl.BlockSpec((1, C, HW), lambda b: (b, 0, 0)),          # x (lane-dense)
            pl.BlockSpec((Cr, C), lambda b: (0, 0)),                # MLP w1
            pl.BlockSpec((C, Cr), lambda b: (0, 0)),                # MLP w2
            pl.BlockSpec((ksize, 16, HW), lambda b: (0, 0, 0)),     # weighted tap masks
            pl.BlockSpec(memory_space=pltpu.MemorySpace.SMEM),      # conv bias
        ],
        out_specs=pl.BlockSpec((1, C, HW), lambda b: (b, 0, 0)),
        scratch_shapes=[pltpu.VMEM((16, HW), jnp.float32)],         # sublane-packed maps
        compiler_params=pltpu.CompilerParams(
            dimension_semantics=("parallel",),
            vmem_limit_bytes=vmem_limit),
    )(x_flat, w1, w2, wmask, bias)
    return out.reshape(B, C, H, W)


# --------------------------------------------------------------------------- #
# Pure-JAX reference (mirrors the PyTorch module semantics)
# --------------------------------------------------------------------------- #
def cbam_ref(x, w1, w2, conv_w, conv_b):
    avg_c = jnp.mean(x, axis=(2, 3))                 # (B, C)
    max_c = jnp.max(x, axis=(2, 3))

    def mlp(v):
        return jnp.maximum(v @ w1.T, 0.0) @ w2.T

    ch = jax.nn.sigmoid(mlp(avg_c) + mlp(max_c))[:, :, None, None]
    x1 = ch * x

    sa = jnp.mean(x1, axis=1, keepdims=True)
    sm = jnp.max(x1, axis=1, keepdims=True)
    cat = jnp.concatenate([sa, sm], axis=1)          # (B, 2, H, W)
    attn = jax.lax.conv_general_dilated(
        cat, conv_w, window_strides=(1, 1), padding=((3, 3), (3, 3)),
        dimension_numbers=("NCHW", "OIHW", "NCHW")) + conv_b.reshape(1, 1, 1, 1)
    attn = jax.nn.sigmoid(attn)
    return (x1 * attn) * x1


if __name__ == "__main__":
    B, C, H, W = 2, 8, 16, 16
    reduction = 4
    Cr = C // reduction

    key = jax.random.PRNGKey(0)
    kx, k1, k2, k3, k4 = jax.random.split(key, 5)
    x = jax.random.normal(kx, (B, C, H, W), dtype=jnp.float32)

    # ChannelAttention shared MLP (1x1 convs, bias=False): (Cr, C) and (C, Cr)
    w1 = 0.2 * jax.random.normal(k1, (Cr, C), dtype=jnp.float32)
    w2 = 0.2 * jax.random.normal(k2, (C, Cr), dtype=jnp.float32)
    # SpatialAttention conv: Conv2d(2, 1, kernel_size=7, padding=3), OIHW + bias
    conv_w = 0.1 * jax.random.normal(k3, (1, 2, 7, 7), dtype=jnp.float32)
    conv_b = 0.05 * jax.random.normal(k4, (1,), dtype=jnp.float32)

    out = cbam_forward(x, w1, w2, conv_w, conv_b)
    out = jax.block_until_ready(out)

    ref = cbam_ref(x, w1, w2, conv_w, conv_b)
    assert out.shape == (B, C, H, W)
    err = jnp.max(jnp.abs(out - ref))
    assert jnp.allclose(out, ref, atol=2e-3, rtol=2e-3), f"max abs err {err}"

    print("KERNEL_OK")
</pallas_src>

<mosaic_0001>
module attributes {stable_mosaic.version = 11 : i64} {
  func.func @cbam_kernel(%arg0: i32, %arg1: memref<1x8x256xf32, #tpu.memory_space<vmem>>, %arg2: memref<2x8xf32, #tpu.memory_space<vmem>>, %arg3: memref<8x2xf32, #tpu.memory_space<vmem>>, %arg4: memref<7x16x256xf32, #tpu.memory_space<vmem>>, %arg5: memref<1xf32, #tpu.memory_space<smem>>, %arg6: memref<1x8x256xf32, #tpu.memory_space<vmem>>, %arg7: memref<16x256xf32, #tpu.memory_space<vmem>>) attributes {dimension_semantics = [#tpu.dimension_semantics<parallel>], iteration_bounds = array<i64: 2>, scalar_prefetch = 0 : i64, scratch_operands = 1 : i64, tpu.core_type = #tpu.core_type<tc>, window_params = [{transform_indices = @transform_0, window_bounds = array<i64: 1, 8, 256>}, {pipeline_mode = #tpu.pipeline_mode<synchronous>, transform_indices = @transform_1, window_bounds = array<i64: 2, 8>}, {pipeline_mode = #tpu.pipeline_mode<synchronous>, transform_indices = @transform_2, window_bounds = array<i64: 8, 2>}, {pipeline_mode = #tpu.pipeline_mode<synchronous>, transform_indices = @transform_3, window_bounds = array<i64: 7, 16, 256>}, {transform_indices = @transform_4, window_bounds = array<i64: 1>}, {transform_indices = @transform_5, window_bounds = array<i64: 1, 8, 256>}]} {
    %c0 = arith.constant 0 : index
    %c0_0 = arith.constant 0 : index
    %c0_1 = arith.constant 0 : index
    %0 = vector.load %arg1[%c0, %c0_0, %c0_1] : memref<1x8x256xf32, #tpu.memory_space<vmem>>, vector<1x8x256xf32>
    %1 = vector.shape_cast %0 : vector<1x8x256xf32> to vector<8x256xf32>
    %cst = arith.constant dense<0.000000e+00> : vector<8xf32>
    %2 = vector.multi_reduction <add>, %1, %cst [1] : vector<8x256xf32> to vector<8xf32>
    %3 = vector.shape_cast %2 : vector<8xf32> to vector<8x1xf32>
    %cst_2 = arith.constant 2.560000e+02 : f32
    %4 = vector.broadcast %cst_2 : f32 to vector<8x1xf32>
    %5 = arith.divf %3, %4 : vector<8x1xf32>
    %cst_3 = arith.constant dense<0xFF800000> : vector<8xf32>
    %6 = vector.multi_reduction <maximumf>, %1, %cst_3 [1] : vector<8x256xf32> to vector<8xf32>
    %7 = vector.shape_cast %6 : vector<8xf32> to vector<8x1xf32>
    %c0_4 = arith.constant 0 : index
    %c0_5 = arith.constant 0 : index
    %8 = vector.load %arg2[%c0_4, %c0_5] : memref<2x8xf32, #tpu.memory_space<vmem>>, vector<2x8xf32>
    %c0_6 = arith.constant 0 : index
    %c0_7 = arith.constant 0 : index
    %9 = vector.load %arg3[%c0_6, %c0_7] : memref<8x2xf32, #tpu.memory_space<vmem>>, vector<8x2xf32>
    %cst_8 = arith.constant dense<0.000000e+00> : vector<2x1xf32>
    %10 = tpu.matmul %8, %5, %cst_8 {dimension_numbers = #tpu.dot_dimension_numbers<[1], [0], [0], [1], [0, 0, 1, 1], [], []>} : vector<2x8xf32>, vector<8x1xf32>, vector<2x1xf32> -> vector<2x1xf32>
    %cst_9 = arith.constant 0.000000e+00 : f32
    %11 = vector.broadcast %cst_9 : f32 to vector<2x1xf32>
    %12 = arith.maximumf %10, %11 : vector<2x1xf32>
    %cst_10 = arith.constant dense<0.000000e+00> : vector<2x1xf32>
    %13 = tpu.matmul %8, %7, %cst_10 {dimension_numbers = #tpu.dot_dimension_numbers<[1], [0], [0], [1], [0, 0, 1, 1], [], []>} : vector<2x8xf32>, vector<8x1xf32>, vector<2x1xf32> -> vector<2x1xf32>
    %cst_11 = arith.constant 0.000000e+00 : f32
    %14 = vector.broadcast %cst_11 : f32 to vector<2x1xf32>
    %15 = arith.maximumf %13, %14 : vector<2x1xf32>
    %cst_12 = arith.constant dense<0.000000e+00> : vector<8x1xf32>
    %16 = tpu.matmul %9, %12, %cst_12 {dimension_numbers = #tpu.dot_dimension_numbers<[1], [0], [0], [1], [0, 0, 1, 1], [], []>} : vector<8x2xf32>, vector<2x1xf32>, vector<8x1xf32> -> vector<8x1xf32>
    %cst_13 = arith.constant dense<0.000000e+00> : vector<8x1xf32>
    %17 = tpu.matmul %9, %15, %cst_13 {dimension_numbers = #tpu.dot_dimension_numbers<[1], [0], [0], [1], [0, 0, 1, 1], [], []>} : vector<8x2xf32>, vector<2x1xf32>, vector<8x1xf32> -> vector<8x1xf32>
    %18 = arith.addf %16, %17 : vector<8x1xf32>
    %19 = arith.negf %18 : vector<8x1xf32>
    %20 = math.exp %19 : vector<8x1xf32>
    %cst_14 = arith.constant 1.000000e+00 : f32
    %21 = vector.broadcast %cst_14 : f32 to vector<8x1xf32>
    %22 = arith.addf %21, %20 : vector<8x1xf32>
    %23 = arith.divf %21, %22 : vector<8x1xf32>
    %24 = vector.broadcast %23 : vector<8x1xf32> to vector<8x256xf32>
    %25 = arith.mulf %1, %24 : vector<8x256xf32>
    %cst_15 = arith.constant dense<0.000000e+00> : vector<256xf32>
    %26 = vector.multi_reduction <add>, %25, %cst_15 [0] : vector<8x256xf32> to vector<256xf32>
    %27 = vector.shape_cast %26 : vector<256xf32> to vector<1x256xf32>
    %cst_16 = arith.constant 8.000000e+00 : f32
    %28 = vector.broadcast %cst_16 : f32 to vector<1x256xf32>
    %29 = arith.divf %27, %28 : vector<1x256xf32>
    %cst_17 = arith.constant dense<0xFF800000> : vector<256xf32>
    %30 = vector.multi_reduction <maximumf>, %25, %cst_17 [0] : vector<8x256xf32> to vector<256xf32>
    %31 = vector.shape_cast %30 : vector<256xf32> to vector<1x256xf32>
    %32 = tpu.concatenate %29, %31 in 0 : vector<1x256xf32>, vector<1x256xf32> -> vector<2x256xf32>
    %cst_18 = arith.constant 0.000000e+00 : f32
    %33 = vector.broadcast %cst_18 : f32 to vector<16x256xf32>
    %c0_19 = arith.constant 0 : index
    %c0_20 = arith.constant 0 : index
    %34 = vector.load %arg7[%c0_19, %c0_20] : memref<16x256xf32, #tpu.memory_space<vmem>>, vector<16x256xf32>
    tpu.vector_store %arg7[%c0_19, %c0_20], %33 {strides = array<i32>} : memref<16x256xf32, #tpu.memory_space<vmem>>, vector<16x256xf32>,
    %c48_i32 = arith.constant 48 : i32
    %35 = tpu.dynamic_rotate %32 by %c48_i32 dim 1 : vector<2x256xf32>, i32 -> vector<2x256xf32>
    %c0_21 = arith.constant 0 : index
    %c0_22 = arith.constant 0 : index
    %36 = vector.load %arg7[%c0_21, %c0_22] : memref<16x256xf32, #tpu.memory_space<vmem>>, vector<2x256xf32>
    tpu.vector_store %arg7[%c0_21, %c0_22], %35 {strides = array<i32>} : memref<16x256xf32, #tpu.memory_space<vmem>>, vector<2x256xf32>,
    %c32_i32 = arith.constant 32 : i32
    %37 = tpu.dynamic_rotate %32 by %c32_i32 dim 1 : vector<2x256xf32>, i32 -> vector<2x256xf32>
    %c2 = arith.constant 2 : index
    %c0_23 = arith.constant 0 : index
    %38 = vector.load %arg7[%c2, %c0_23] : memref<16x256xf32, #tpu.memory_space<vmem>>, vector<2x256xf32>
    tpu.vector_store %arg7[%c2, %c0_23], %37 {strides = array<i32>} : memref<16x256xf32, #tpu.memory_space<vmem>>, vector<2x256xf32>,
    %c16_i32 = arith.constant 16 : i32
    %39 = tpu.dynamic_rotate %32 by %c16_i32 dim 1 : vector<2x256xf32>, i32 -> vector<2x256xf32>
    %c4 = arith.constant 4 : index
    %c0_24 = arith.constant 0 : index
    %40 = vector.load %arg7[%c4, %c0_24] : memref<16x256xf32, #tpu.memory_space<vmem>>, vector<2x256xf32>
    tpu.vector_store %arg7[%c4, %c0_24], %39 {strides = array<i32>} : memref<16x256xf32, #tpu.memory_space<vmem>>, vector<2x256xf32>,
    %c6 = arith.constant 6 : index
    %c0_25 = arith.constant 0 : index
    %41 = vector.load %arg7[%c6, %c0_25] : memref<16x256xf32, #tpu.memory_space<vmem>>, vector<2x256xf32>
    tpu.vector_store %arg7[%c6, %c0_25], %32 {strides = array<i32>} : memref<16x256xf32, #tpu.memory_space<vmem>>, vector<2x256xf32>,
    %c240_i32 = arith.constant 240 : i32
    %42 = tpu.dynamic_rotate %32 by %c240_i32 dim 1 : vector<2x256xf32>, i32 -> vector<2x256xf32>
    %c8 = arith.constant 8 : index
    %c0_26 = arith.constant 0 : index
    %43 = vector.load %arg7[%c8, %c0_26] : memref<16x256xf32, #tpu.memory_space<vmem>>, vector<2x256xf32>
    tpu.vector_store %arg7[%c8, %c0_26], %42 {strides = array<i32>} : memref<16x256xf32, #tpu.memory_space<vmem>>, vector<2x256xf32>,
    %c224_i32 = arith.constant 224 : i32
    %44 = tpu.dynamic_rotate %32 by %c224_i32 dim 1 : vector<2x256xf32>, i32 -> vector<2x256xf32>
    %c10 = arith.constant 10 : index
    %c0_27 = arith.constant 0 : index
    %45 = vector.load %arg7[%c10, %c0_27] : memref<16x256xf32, #tpu.memory_space<vmem>>, vector<2x256xf32>
    tpu.vector_store %arg7[%c10, %c0_27], %44 {strides = array<i32>} : memref<16x256xf32, #tpu.memory_space<vmem>>, vector<2x256xf32>,
    %c208_i32 = arith.constant 208 : i32
    %46 = tpu.dynamic_rotate %32 by %c208_i32 dim 1 : vector<2x256xf32>, i32 -> vector<2x256xf32>
    %c12 = arith.constant 12 : index
    %c0_28 = arith.constant 0 : index
    %47 = vector.load %arg7[%c12, %c0_28] : memref<16x256xf32, #tpu.memory_space<vmem>>, vector<2x256xf32>
    tpu.vector_store %arg7[%c12, %c0_28], %46 {strides = array<i32>} : memref<16x256xf32, #tpu.memory_space<vmem>>, vector<2x256xf32>,
    %c0_29 = arith.constant 0 : index
    %c0_30 = arith.constant 0 : index
    %48 = vector.load %arg7[%c0_29, %c0_30] : memref<16x256xf32, #tpu.memory_space<vmem>>, vector<16x256xf32>
    %cst_31 = arith.constant 0.000000e+00 : f32
    %49 = vector.broadcast %cst_31 : f32 to vector<16x256xf32>
    %c3_i32 = arith.constant 3 : i32
    %50 = tpu.dynamic_rotate %48 by %c3_i32 dim 1 : vector<16x256xf32>, i32 -> vector<16x256xf32>
    %c0_32 = arith.constant 0 : index
    %c0_33 = arith.constant 0 : index
    %c0_34 = arith.constant 0 : index
    %51 = vector.load %arg4[%c0_32, %c0_33, %c0_34] : memref<7x16x256xf32, #tpu.memory_space<vmem>>, vector<1x16x256xf32>
    %52 = vector.shape_cast %51 : vector<1x16x256xf32> to vector<16x256xf32>
    %53 = arith.mulf %50, %52 : vector<16x256xf32>
    %54 = arith.addf %49, %53 : vector<16x256xf32>
    %c2_i32 = arith.constant 2 : i32
    %55 = tpu.dynamic_rotate %48 by %c2_i32 dim 1 : vector<16x256xf32>, i32 -> vector<16x256xf32>
    %c1 = arith.constant 1 : index
    %c0_35 = arith.constant 0 : index
    %c0_36 = arith.constant 0 : index
    %56 = vector.load %arg4[%c1, %c0_35, %c0_36] : memref<7x16x256xf32, #tpu.memory_space<vmem>>, vector<1x16x256xf32>
    %57 = vector.shape_cast %56 : vector<1x16x256xf32> to vector<16x256xf32>
    %58 = arith.mulf %55, %57 : vector<16x256xf32>
    %59 = arith.addf %54, %58 : vector<16x256xf32>
    %c1_i32 = arith.constant 1 : i32
    %60 = tpu.dynamic_rotate %48 by %c1_i32 dim 1 : vector<16x256xf32>, i32 -> vector<16x256xf32>
    %c2_37 = arith.constant 2 : index
    %c0_38 = arith.constant 0 : index
    %c0_39 = arith.constant 0 : index
    %61 = vector.load %arg4[%c2_37, %c0_38, %c0_39] : memref<7x16x256xf32, #tpu.memory_space<vmem>>, vector<1x16x256xf32>
    %62 = vector.shape_cast %61 : vector<1x16x256xf32> to vector<16x256xf32>
    %63 = arith.mulf %60, %62 : vector<16x256xf32>
    %64 = arith.addf %59, %63 : vector<16x256xf32>
    %c3 = arith.constant 3 : index
    %c0_40 = arith.constant 0 : index
    %c0_41 = arith.constant 0 : index
    %65 = vector.load %arg4[%c3, %c0_40, %c0_41] : memref<7x16x256xf32, #tpu.memory_space<vmem>>, vector<1x16x256xf32>
    %66 = vector.shape_cast %65 : vector<1x16x256xf32> to vector<16x256xf32>
    %67 = arith.mulf %48, %66 : vector<16x256xf32>
    %68 = arith.addf %64, %67 : vector<16x256xf32>
    %c255_i32 = arith.constant 255 : i32
    %69 = tpu.dynamic_rotate %48 by %c255_i32 dim 1 : vector<16x256xf32>, i32 -> vector<16x256xf32>
    %c4_42 = arith.constant 4 : index
    %c0_43 = arith.constant 0 : index
    %c0_44 = arith.constant 0 : index
    %70 = vector.load %arg4[%c4_42, %c0_43, %c0_44] : memref<7x16x256xf32, #tpu.memory_space<vmem>>, vector<1x16x256xf32>
    %71 = vector.shape_cast %70 : vector<1x16x256xf32> to vector<16x256xf32>
    %72 = arith.mulf %69, %71 : vector<16x256xf32>
    %73 = arith.addf %68, %72 : vector<16x256xf32>
    %c254_i32 = arith.constant 254 : i32
    %74 = tpu.dynamic_rotate %48 by %c254_i32 dim 1 : vector<16x256xf32>, i32 -> vector<16x256xf32>
    %c5 = arith.constant 5 : index
    %c0_45 = arith.constant 0 : index
    %c0_46 = arith.constant 0 : index
    %75 = vector.load %arg4[%c5, %c0_45, %c0_46] : memref<7x16x256xf32, #tpu.memory_space<vmem>>, vector<1x16x256xf32>
    %76 = vector.shape_cast %75 : vector<1x16x256xf32> to vector<16x256xf32>
    %77 = arith.mulf %74, %76 : vector<16x256xf32>
    %78 = arith.addf %73, %77 : vector<16x256xf32>
    %c253_i32 = arith.constant 253 : i32
    %79 = tpu.dynamic_rotate %48 by %c253_i32 dim 1 : vector<16x256xf32>, i32 -> vector<16x256xf32>
    %c6_47 = arith.constant 6 : index
    %c0_48 = arith.constant 0 : index
    %c0_49 = arith.constant 0 : index
    %80 = vector.load %arg4[%c6_47, %c0_48, %c0_49] : memref<7x16x256xf32, #tpu.memory_space<vmem>>, vector<1x16x256xf32>
    %81 = vector.shape_cast %80 : vector<1x16x256xf32> to vector<16x256xf32>
    %82 = arith.mulf %79, %81 : vector<16x256xf32>
    %83 = arith.addf %78, %82 : vector<16x256xf32>
    %cst_50 = arith.constant dense<0.000000e+00> : vector<256xf32>
    %84 = vector.multi_reduction <add>, %83, %cst_50 [0] : vector<16x256xf32> to vector<256xf32>
    %85 = vector.shape_cast %84 : vector<256xf32> to vector<1x256xf32>
    %c0_51 = arith.constant 0 : index
    %86 = memref.load %arg5[%c0_51] : memref<1xf32, #tpu.memory_space<smem>>
    %87 = vector.broadcast %86 : f32 to vector<1x256xf32>
    %88 = arith.addf %85, %87 : vector<1x256xf32>
    %89 = arith.negf %88 : vector<1x256xf32>
    %90 = math.exp %89 : vector<1x256xf32>
    %cst_52 = arith.constant 1.000000e+00 : f32
    %91 = vector.broadcast %cst_52 : f32 to vector<1x256xf32>
    %92 = arith.addf %91, %90 : vector<1x256xf32>
    %93 = arith.divf %91, %92 : vector<1x256xf32>
    %94 = vector.broadcast %93 : vector<1x256xf32> to vector<8x256xf32>
    %95 = arith.mulf %25, %94 : vector<8x256xf32>
    %96 = arith.mulf %95, %25 : vector<8x256xf32>
    %c0_53 = arith.constant 0 : index
    %c0_54 = arith.constant 0 : index
    %c0_55 = arith.constant 0 : index
    %97 = vector.load %arg6[%c0_53, %c0_54, %c0_55] : memref<1x8x256xf32, #tpu.memory_space<vmem>>, vector<1x8x256xf32>
    %98 = vector.shape_cast %97 : vector<1x8x256xf32> to vector<8x256xf32>
    %99 = vector.shape_cast %96 : vector<8x256xf32> to vector<1x8x256xf32>
    tpu.vector_store %arg6[%c0_53, %c0_54, %c0_55], %99 {strides = array<i32>} : memref<1x8x256xf32, #tpu.memory_space<vmem>>, vector<1x8x256xf32>,
    return
  }
  func.func @transform_0(%arg0: i32) -> (i32, i32, i32) {
    %c0_i32 = arith.constant 0 : i32
    %c0_i32_0 = arith.constant 0 : i32
    %c0_i32_1 = arith.constant 0 : i32
    return %arg0, %c0_i32, %c0_i32_0 : i32, i32, i32
  }
  func.func @transform_1(%arg0: i32) -> (i32, i32) {
    %c0_i32 = arith.constant 0 : i32
    %c0_i32_0 = arith.constant 0 : i32
    %c0_i32_1 = arith.constant 0 : i32
    return %c0_i32, %c0_i32_0 : i32, i32
  }
  func.func @transform_2(%arg0: i32) -> (i32, i32) {
    %c0_i32 = arith.constant 0 : i32
    %c0_i32_0 = arith.constant 0 : i32
    %c0_i32_1 = arith.constant 0 : i32
    return %c0_i32, %c0_i32_0 : i32, i32
  }
  func.func @transform_3(%arg0: i32) -> (i32, i32, i32) {
    %c0_i32 = arith.constant 0 : i32
    %c0_i32_0 = arith.constant 0 : i32
    %c0_i32_1 = arith.constant 0 : i32
    %c0_i32_2 = arith.constant 0 : i32
    return %c0_i32, %c0_i32_0, %c0_i32_1 : i32, i32, i32
  }
  func.func @transform_4(%arg0: i32) -> i32 {
    %c0_i32 = arith.constant 0 : i32
    %c0_i32_0 = arith.constant 0 : i32
    return %c0_i32 : i32
  }
  func.func @transform_5(%arg0: i32) -> (i32, i32, i32) {
    %c0_i32 = arith.constant 0 : i32
    %c0_i32_0 = arith.constant 0 : i32
    %c0_i32_1 = arith.constant 0 : i32
    return %arg0, %c0_i32, %c0_i32_0 : i32, i32, i32
  }
}

</mosaic_0001>

<llo_original>
// kernel: tpu_custom_call.1
$region0: #{tpu_custom_call.1}
  #allocation0 [shape = 'u32[]', space=smem, size = 0x4, offset = 0x4, fixed_abs, tag = 'smem constant byte address 0x4 - core index']
  #allocation1 [shape = 'u32[144,128]{1,0:T(1,128)}', space=vmem, size = 0x12000, scoped, tag = 'internal scratch']
  #allocation2 [shape = 'f32[16,256]{1,0:T(8,128)}', space=vmem, size = 0x4000, scoped, tag = 'scratch operand']
  #allocation3 [shape = 'f32[1]{0:T(128)S(6)}', space=smem, size = 0x200, scoped, tag = 'scoped memory for tpu_custom_call.1']
  %s0 = inlined_call_operand.hbm [shape: f32[2,8,256], index: 0, kind: input, shape index: {}]
  %s1 = inlined_call_operand.vmem [shape: f32[2,8], index: 1, kind: input, shape index: {}]
  %s2 = inlined_call_operand.vmem [shape: f32[8,2], index: 2, kind: input, shape index: {}]
  %s3 = inlined_call_operand.hbm [shape: f32[7,16,256], index: 3, kind: input, shape index: {}]
  %s4 = inlined_call_operand.<no memory space> [shape: f32[1], index: 4, kind: input, shape index: {}]
  %s5 = inlined_call_operand.hbm [shape: f32[2,8,256], index: 5, kind: output, shape index: {}]
  %s6 = sld [smem:[#allocation0]]
  $region61: #{tpu_custom_call.1} parent=0
    _
  %s8 = ssub.s32 1, %s6
  %s9 = scalar_select 0, %s8, %s6
  %10 = sst [smem:[#allocation3]] %s4
  $region1: #{tpu_custom_call.1} parent=0
    #allocation4 [shape = 'u8[16384]{0}', space=vmem, size = 0x4000, scoped, tag = 'input window, operand 0']
    #allocation5 [shape = 's32[2]{0}', space=sflag, size = 0x8, scoped, tag = 'scoped memory for tpu_custom_call.1']
    #allocation6 [shape = 's32[2]{0}', space=sflag, size = 0x8, scoped, tag = 'scoped memory for tpu_custom_call.1']
    #allocation7 [shape = 'u8[114688]{0}', space=vmem, size = 0x1c000, scoped, tag = 'input window, operand 3, single buffered']
    #allocation8 [shape = 's32[1]{0}', space=sflag, size = 0x4, scoped, tag = 'scoped memory for tpu_custom_call.1']
    #allocation9 [shape = 'u8[16384]{0}', space=vmem, size = 0x4000, scoped, tag = 'output window, operand 0']
    %11 = vsyncpa [#allocation5], 0
    %s12 = scalar_lea.sflag [#allocation5], 1
    %13 = vsyncpa %s12, 0
    %14 = vsyncpa [#allocation8], 0
    %15 = vsyncpa [#allocation6], 0
    %s16 = scalar_lea.sflag [#allocation6], 1
    %17 = vsyncpa %s16, 0
    loop: start=0, step=1, limit=4
    $region2: #{tpu_custom_call.1} parent=1 // loop_pre_header
      _
    $region3: #{tpu_custom_call.1} parent=1 // loop_header
      %s19 = sphi 0, %s23
      %p20 = scmp.ge.s32.totalorder %s19, 4
      %s29 = sphi 0, %s31
      %s32 = sphi 0, %s29
      %s33 = sphi 0, %s32
      %s49 = sphi 0, %s33
      %s53 = sphi 0, %s53
      %s55 = sphi 0, %s53
      %s56 = sphi 0, %s55
      %s70 = sphi 0, %s56
      %s74 = sphi 0, %s74
      %s76 = sphi 0, %s74
      %s77 = sphi 0, %s76
      %s91 = sphi 0, %s77
      %s95 = sphi 0, %s95
      %s97 = sphi 0, %s95
      %s98 = sphi 0, %s97
      %s112 = sphi 0, %s98
      %s116 = sphi 0, %s116
      %s118 = sphi 0, %s116
      %s119 = sphi 0, %s118
      %s133 = sphi 0, %s119
      %s139 = sphi 0, %s141
      %s142 = sphi 0, %s139
      %s143 = sphi 0, %s142
      %s159 = sphi 0, %s143
    $region4: #{tpu_custom_call.1} parent=1 // loop_header_branch
      %22 = sbr.rel (%p20) target = $region8
    $region5: #{tpu_custom_call.1} parent=1 // loop_body
      %s24 = ssub.s32 %s19, 1
      %s25 = ssub.s32 %s19, 2
      %s26 = sadd.s32 %s19, 1
      %s27 = ssub.s32 %s19, %s26
      %p28 = scmp.eq.s32.totalorder %s27, 0
      %s30 = sadd.s32 %s29, 1
      %s31 = scalar_select %p28, %s29, %s30
      %p34 = pneg %p28
      %p35 = scmp.eq.s32.totalorder %s19, 1
      %p36 = por %p34, %p35
      %p37 = scmp.ne.s32.totalorder %s29, %s32
      %p38 = scmp.eq.s32.totalorder %s19, 0
      %p39 = por %p37, %p38
      %p40 = scmp.ne.s32.totalorder %s29, %s32
      %p41 = scmp.eq.s32.totalorder %s24, 1
      %p42 = por %p40, %p41
      %p43 = scmp.ne.s32.totalorder %s32, %s33
      %p44 = scmp.eq.s32.totalorder %s24, 0
      %p45 = por %p43, %p44
      %p46 = scmp.ne.s32.totalorder %s32, %s33
      %p47 = scmp.eq.s32.totalorder %s25, 1
      %p48 = por %p46, %p47
      %p50 = scmp.ne.s32.totalorder %s33, %s49
      %p51 = scmp.eq.s32.totalorder %s25, 0
      %p52 = por %p50, %p51
      %s54 = sadd.s32 %s53, 1
      %p57 = scmp.eq.s32.totalorder %s19, 1
      %p58 = scmp.ne.s32.totalorder %s53, %s55
      %p59 = scmp.eq.s32.totalorder %s19, 0
      %p60 = por %p58, %p59
      %p61 = scmp.ne.s32.totalorder %s53, %s55
      %p62 = scmp.eq.s32.totalorder %s24, 1
      %p63 = por %p61, %p62
      %p64 = scmp.ne.s32.totalorder %s55, %s56
      %p65 = scmp.eq.s32.totalorder %s24, 0
      %p66 = por %p64, %p65
      %p67 = scmp.ne.s32.totalorder %s55, %s56
      %p68 = scmp.eq.s32.totalorder %s25, 1
      %p69 = por %p67, %p68
      %p71 = scmp.ne.s32.totalorder %s56, %s70
      %p72 = scmp.eq.s32.totalorder %s25, 0
      %p73 = por %p71, %p72
      %s75 = sadd.s32 %s74, 1
      %p78 = scmp.eq.s32.totalorder %s19, 1
      %p79 = scmp.ne.s32.totalorder %s74, %s76
      %p80 = scmp.eq.s32.totalorder %s19, 0
      %p81 = por %p79, %p80
      %p82 = scmp.ne.s32.totalorder %s74, %s76
      %p83 = scmp.eq.s32.totalorder %s24, 1
      %p84 = por %p82, %p83
      %p85 = scmp.ne.s32.totalorder %s76, %s77
      %p86 = scmp.eq.s32.totalorder %s24, 0
      %p87 = por %p85, %p86
      %p88 = scmp.ne.s32.totalorder %s76, %s77
      %p89 = scmp.eq.s32.totalorder %s25, 1
      %p90 = por %p88, %p89
      %p92 = scmp.ne.s32.totalorder %s77, %s91
      %p93 = scmp.eq.s32.totalorder %s25, 0
      %p94 = por %p92, %p93
      %s96 = sadd.s32 %s95, 1
      %p99 = scmp.eq.s32.totalorder %s19, 1
      %p100 = scmp.ne.s32.totalorder %s95, %s97
      %p101 = scmp.eq.s32.totalorder %s19, 0
      %p102 = por %p100, %p101
      %p103 = scmp.ne.s32.totalorder %s95, %s97
      %p104 = scmp.eq.s32.totalorder %s24, 1
      %p105 = por %p103, %p104
      %p106 = scmp.ne.s32.totalorder %s97, %s98
      %p107 = scmp.eq.s32.totalorder %s24, 0
      %p108 = por %p106, %p107
      %p109 = scmp.ne.s32.totalorder %s97, %s98
      %p110 = scmp.eq.s32.totalorder %s25, 1
      %p111 = por %p109, %p110
      %p113 = scmp.ne.s32.totalorder %s98, %s112
      %p114 = scmp.eq.s32.totalorder %s25, 0
      %p115 = por %p113, %p114
      %s117 = sadd.s32 %s116, 1
      %p120 = scmp.eq.s32.totalorder %s19, 1
      %p121 = scmp.ne.s32.totalorder %s116, %s118
      %p122 = scmp.eq.s32.totalorder %s19, 0
      %p123 = por %p121, %p122
      %p124 = scmp.ne.s32.totalorder %s116, %s118
      %p125 = scmp.eq.s32.totalorder %s24, 1
      %p126 = por %p124, %p125
      %p127 = scmp.ne.s32.totalorder %s118, %s119
      %p128 = scmp.eq.s32.totalorder %s24, 0
      %p129 = por %p127, %p128
      %p130 = scmp.ne.s32.totalorder %s118, %s119
      %p131 = scmp.eq.s32.totalorder %s25, 1
      %p132 = por %p130, %p131
      %p134 = scmp.ne.s32.totalorder %s119, %s133
      %p135 = scmp.eq.s32.totalorder %s25, 0
      %p136 = por %p134, %p135
      %s137 = ssub.s32 %s19, %s26
      %p138 = scmp.eq.s32.totalorder %s137, 0
      %s140 = sadd.s32 %s139, 1
      %s141 = scalar_select %p138, %s139, %s140
      %p144 = pneg %p138
      %p145 = scmp.eq.s32.totalorder %s19, 1
      %p146 = por %p144, %p145
      %p147 = scmp.ne.s32.totalorder %s139, %s142
      %p148 = scmp.eq.s32.totalorder %s19, 0
      %p149 = por %p147, %p148
      %p150 = scmp.ne.s32.totalorder %s139, %s142
      %p151 = scmp.eq.s32.totalorder %s24, 1
      %p152 = por %p150, %p151
      %p153 = scmp.ne.s32.totalorder %s142, %s143
      %p154 = scmp.eq.s32.totalorder %s24, 0
      %p155 = por %p153, %p154
      %p156 = scmp.ne.s32.totalorder %s142, %s143
      %p157 = scmp.eq.s32.totalorder %s25, 1
      %p158 = por %p156, %p157
      %p160 = scmp.ne.s32.totalorder %s143, %s159
      %p161 = scmp.eq.s32.totalorder %s25, 0
      %p162 = por %p160, %p161
      %p163 = scmp.le.s32.totalorder 1, %s19
      %p164 = scmp.lt.s32.totalorder %s19, 3
      %p165 = pnand %p163, %p164
      %p166 = pneg %p165
      // Predicated region
      $region9: #{tpu_custom_call.1} parent=5 // pred_check
        _
      $region10: #{tpu_custom_call.1} parent=5 // pred_check_branch
        %168 = sbr.rel (%p165) target = $region12
      $region11: #{tpu_custom_call.1} parent=5 // pred_region
        %s169 = ssub.s32 %s19, 1
        // Predicated region
        $region13: #{tpu_custom_call.1} parent=11 // pred_check
          %p170 = pneg %p66
        $region14: #{tpu_custom_call.1} parent=11 // pred_check_branch
          %172 = sbr.rel (%p170) target = $region16
        $region15: #{tpu_custom_call.1} parent=11 // pred_region
          _
        $region16: #{tpu_custom_call.1} parent=11 // pred_fallthru
          _
        // Predicated region
        $region17: #{tpu_custom_call.1} parent=11 // pred_check
          %p173 = pneg %p87
        $region18: #{tpu_custom_call.1} parent=11 // pred_check_branch
          %175 = sbr.rel (%p173) target = $region20
        $region19: #{tpu_custom_call.1} parent=11 // pred_region
          _
        $region20: #{tpu_custom_call.1} parent=11 // pred_fallthru
          _
        // Predicated region
        $region21: #{tpu_custom_call.1} parent=11 // pred_check
          %p176 = pneg %p108
        $region22: #{tpu_custom_call.1} parent=11 // pred_check_branch
          %178 = sbr.rel (%p176) target = $region24
        $region23: #{tpu_custom_call.1} parent=11 // pred_region
          %s180 = ssub.s32 3584, 3584
          %181 = vsyncadd [#allocation8], %s180
          %s182 = sshll.u32 [#allocation7], 4
          %s183 = int_to_ptr.vmem [resolvable:$true] %s182
          %188 = dma.hbm_to_vmem [thread:$0]  %s3, 3584, %s183, [#allocation8], 256, 256, 16
        $region24: #{tpu_custom_call.1} parent=11 // pred_fallthru
          _
        // Predicated region
        $region25: #{tpu_custom_call.1} parent=11 // pred_check
          %p189 = pneg %p129
        $region26: #{tpu_custom_call.1} parent=11 // pred_check_branch
          %191 = sbr.rel (%p189) target = $region28
        $region27: #{tpu_custom_call.1} parent=11 // pred_region
          _
        $region28: #{tpu_custom_call.1} parent=11 // pred_fallthru
          _
      $region12: #{tpu_custom_call.1} parent=5 // pred_fallthru
        _
      %p192 = scmp.lt.s32.totalorder %s19, 2
      // Predicated region
      $region29: #{tpu_custom_call.1} parent=5 // pred_check
        %p193 = pneg %p192
      $region30: #{tpu_custom_call.1} parent=5 // pred_check_branch
        %195 = sbr.rel (%p193) target = $region32
      $region31: #{tpu_custom_call.1} parent=5 // pred_region
        // Predicated region
        $region33: #{tpu_custom_call.1} parent=31 // pred_check
          %p196 = pneg %p39
        $region34: #{tpu_custom_call.1} parent=31 // pred_check_branch
          %198 = sbr.rel (%p196) target = $region36
        $region35: #{tpu_custom_call.1} parent=31 // pred_region
          %s199 = sand.u32 %s29, 1
          %s200 = scalar_lea.sflag [#allocation5], %s199
          %s201 = sand.u32 %s29, 1
          %s202 = smul.addr %s201, 16
          %s203 = scalar_lea.vmem [#allocation4], %s202
          %s205 = ssub.s32 256, 256
          %206 = vsyncadd %s200, %s205
          %s207 = smul.addr %s19, 2
          %s208 = smul.addr %s207, 128
          %s209 = scalar_lea.hbm %s0, %s208
          %s211 = sshll.u32 %s203, 4
          %s212 = int_to_ptr.vmem [resolvable:$true] %s211
          %214 = dma.hbm_to_vmem [thread:$0]  %s209, 256, %s212, %s200
        $region36: #{tpu_custom_call.1} parent=31 // pred_fallthru
          _
      $region32: #{tpu_custom_call.1} parent=5 // pred_fallthru
        _
      %p215 = scmp.le.s32.totalorder 1, %s19
      %p216 = scmp.lt.s32.totalorder %s19, 3
      %p217 = pnand %p215, %p216
      %p218 = pneg %p217
      // Predicated region
      $region37: #{tpu_custom_call.1} parent=5 // pred_check
        _
      $region38: #{tpu_custom_call.1} parent=5 // pred_check_branch
        %220 = sbr.rel (%p217) target = $region40
      $region39: #{tpu_custom_call.1} parent=5 // pred_region
        %s221 = ssub.s32 %s19, 1
        %s222 = sand.u32 %s32, 1
        %s223 = scalar_lea.sflag [#allocation5], %s222
        %s224 = sand.u32 %s32, 1
        %s225 = smul.addr %s224, 16
        %s226 = scalar_lea.vmem [#allocation4], %s225
        // Predicated region
        $region41: #{tpu_custom_call.1} parent=39 // pred_check
          %p227 = pneg %p45
        $region42: #{tpu_custom_call.1} parent=39 // pred_check_branch
          %229 = sbr.rel (%p227) target = $region44
        $region43: #{tpu_custom_call.1} parent=39 // pred_region
          %230 = dma.done %s223, 256
        $region44: #{tpu_custom_call.1} parent=39 // pred_fallthru
          _
        // Predicated region
        $region45: #{tpu_custom_call.1} parent=39 // pred_check
          %p231 = pneg %p108
        $region46: #{tpu_custom_call.1} parent=39 // pred_check_branch
          %233 = sbr.rel (%p231) target = $region48
        $region47: #{tpu_custom_call.1} parent=39 // pred_region
          %234 = dma.done [#allocation8], 3584
        $region48: #{tpu_custom_call.1} parent=39 // pred_fallthru
          _
        %s235 = sand.u32 %s32, 1
        %s236 = scalar_lea.sflag [#allocation5], %s235
        %s237 = sand.u32 %s32, 1
        %s238 = smul.addr %s237, 16
        %s239 = scalar_lea.vmem [#allocation4], %s238
        %p240 = pneg %p45
        %p241 = pneg %p42
        %p242 = pneg %p66
        %p243 = pneg %p63
        %p244 = pneg %p87
        %p245 = pneg %p84
        %p246 = pneg %p108
        %p247 = pneg %p105
        %p248 = pneg %p129
        %p249 = pneg %p126
        %p250 = pneg %p155
        %p251 = pneg %p152
        %s252 = sand.u32 %s142, 1
        %s253 = scalar_lea.sflag [#allocation6], %s252
        %s254 = sand.u32 %s142, 1
        %s255 = smul.addr %s254, 16
        %s256 = scalar_lea.vmem [#allocation9], %s255
        %v257 = vld [vmem:[%s226] sm:$0xff]
        %v258 = vld [vmem:[%s226 + $0x8] sm:$0xff]
        %v259 = vadd.f32 %v257, %v258
        %260 = vadd.xlane.f32.xlu0 %v259
        %v261 = vpop.xlane.xlu0 %260
        %v262 = vrcp.pop 256.0
        %v263 = vmul.f32 %v261, %v262
        %v264 = vmax.f32 %v257, %v258
        %265 = vmax.xlane.f32.xlu0 %v264
        %v266 = vpop.xlane.xlu0 %265
        %v267 = vld [vmem:[%s1] sm:$0x3]
        %v268 = vld [vmem:[%s2] sm:$0xff]
        %vm269 = vcmask 64512
        %v271 = vsel %vm269, %v267, 0
        %273 = vmatprep.subr.mxu0 0.0
        %274 = vmatpush1.msra.mxu0 0.0
        %275 = vmatprep.subr.mxu0 0.0
        %276 = vmatpush1.msra.mxu0 0.0
        %277 = vmatprep.subr.mxu0 0.0
        %278 = vmatpush1.msra.mxu0 0.0
        %279 = vmatprep.subr.mxu0 0.0
        %280 = vmatpush1.msra.mxu0 0.0
        %281 = vmatprep.subr.mxu0 0.0
        %282 = vmatpush1.msra.mxu0 0.0
        %283 = vmatprep.subr.mxu0 0.0
        %284 = vmatpush1.msra.mxu0 0.0
        %285 = vmatprep.subr.mxu0 0.0
        %286 = vmatpush1.msra.mxu0 0.0
        %287 = vmatprep.subr.mxu0 0.0
        %288 = vmatpush1.msra.mxu0 0.0
        %289 = vmatprep.subr.mxu0 0.0
        %290 = vmatpush1.msra.mxu0 0.0
        %291 = vmatprep.subr.mxu0 0.0
        %292 = vmatpush1.msra.mxu0 0.0
        %293 = vmatprep.subr.mxu0 0.0
        %294 = vmatpush1.msra.mxu0 0.0
        %295 = vmatprep.subr.mxu0 0.0
        %296 = vmatpush1.msra.mxu0 0.0
        %297 = vmatprep.subr.mxu0 0.0
        %298 = vmatpush1.msra.mxu0 0.0
        %299 = vmatprep.subr.mxu0 0.0
        %300 = vmatpush1.msra.mxu0 0.0
        %301 = vmatprep.subr.mxu0 0.0
        %302 = vmatpush1.msra.mxu0 0.0
        %303 = vmatprep.subr.mxu0 0.0
        %304 = vmatpush1.msra.mxu0 %v263
        %305 = vmatprep.subr.mxu0 0.0
        %306 = vmatpush2.msra.mxu0 0.0
        %307 = vmatprep.subr.mxu0 0.0
        %308 = vmatpush2.msra.mxu0 0.0
        %309 = vmatprep.subr.mxu0 0.0
        %310 = vmatpush2.msra.mxu0 0.0
        %311 = vmatprep.subr.mxu0 0.0
        %312 = vmatpush2.msra.mxu0 0.0
        %313 = vmatprep.subr.mxu0 0.0
        %314 = vmatpush2.msra.mxu0 0.0
        %315 = vmatprep.subr.mxu0 0.0
        %316 = vmatpush2.msra.mxu0 0.0
        %317 = vmatprep.subr.mxu0 0.0
        %318 = vmatpush2.msra.mxu0 0.0
        %319 = vmatprep.subr.mxu0 0.0
        %320 = vmatpush2.msra.mxu0 0.0
        %321 = vmatprep.subr.mxu0 0.0
        %322 = vmatpush2.msra.mxu0 0.0
        %323 = vmatprep.subr.mxu0 0.0
        %324 = vmatpush2.msra.mxu0 0.0
        %325 = vmatprep.subr.mxu0 0.0
        %326 = vmatpush2.msra.mxu0 0.0
        %327 = vmatprep.subr.mxu0 0.0
        %328 = vmatpush2.msra.mxu0 0.0
        %329 = vmatprep.subr.mxu0 0.0
        %330 = vmatpush2.msra.mxu0 0.0
        %331 = vmatprep.subr.mxu0 0.0
        %332 = vmatpush2.msra.mxu0 0.0
        %333 = vmatprep.subr.mxu0 0.0
        %334 = vmatpush2.msra.mxu0 0.0
        %335 = vmatprep.subr.mxu0 0.0
        %336 = vmatpush2.msra.mxu0 0.0
        %337 = vmatprep.mubr.f32.mxu0 0.0
        %338 = vmatmul.mubr.f32.gmra.mxu0 %v271
        %v339 = vpop.f32.mrf.mxu0
        %v340 = vadd.f32 0.0, %v339
        %v341 = vpop.f32.mrf.mxu0
        %342 = vdwg.mxu0
        %v343 = vmax.f32 %v340, 0.0
        %344 = vmatprep.subr.mxu0 0.0
        %345 = vmatpush1.msra.mxu0 0.0
        %346 = vmatprep.subr.mxu0 0.0
        %347 = vmatpush1.msra.mxu0 0.0
        %348 = vmatprep.subr.mxu0 0.0
        %349 = vmatpush1.msra.mxu0 0.0
        %350 = vmatprep.subr.mxu0 0.0
        %351 = vmatpush1.msra.mxu0 0.0
        %352 = vmatprep.subr.mxu0 0.0
        %353 = vmatpush1.msra.mxu0 0.0
        %354 = vmatprep.subr.mxu0 0.0
        %355 = vmatpush1.msra.mxu0 0.0
        %356 = vmatprep.subr.mxu0 0.0
        %357 = vmatpush1.msra.mxu0 0.0
        %358 = vmatprep.subr.mxu0 0.0
        %359 = vmatpush1.msra.mxu0 0.0
        %360 = vmatprep.subr.mxu0 0.0
        %361 = vmatpush1.msra.mxu0 0.0
        %362 = vmatprep.subr.mxu0 0.0
        %363 = vmatpush1.msra.mxu0 0.0
        %364 = vmatprep.subr.mxu0 0.0
        %365 = vmatpush1.msra.mxu0 0.0
        %366 = vmatprep.subr.mxu0 0.0
        %367 = vmatpush1.msra.mxu0 0.0
        %368 = vmatprep.subr.mxu0 0.0
        %369 = vmatpush1.msra.mxu0 0.0
        %370 = vmatprep.subr.mxu0 0.0
        %371 = vmatpush1.msra.mxu0 0.0
        %372 = vmatprep.subr.mxu0 0.0
        %373 = vmatpush1.msra.mxu0 0.0
        %374 = vmatprep.subr.mxu0 0.0
        %375 = vmatpush1.msra.mxu0 %v266
        %376 = vmatprep.subr.mxu0 0.0
        %377 = vmatpush2.msra.mxu0 0.0
        %378 = vmatprep.subr.mxu0 0.0
        %379 = vmatpush2.msra.mxu0 0.0
        %380 = vmatprep.subr.mxu0 0.0
        %381 = vmatpush2.msra.mxu0 0.0
        %382 = vmatprep.subr.mxu0 0.0
        %383 = vmatpush2.msra.mxu0 0.0
        %384 = vmatprep.subr.mxu0 0.0
        %385 = vmatpush2.msra.mxu0 0.0
        %386 = vmatprep.subr.mxu0 0.0
        %387 = vmatpush2.msra.mxu0 0.0
        %388 = vmatprep.subr.mxu0 0.0
        %389 = vmatpush2.msra.mxu0 0.0
        %390 = vmatprep.subr.mxu0 0.0
        %391 = vmatpush2.msra.mxu0 0.0
        %392 = vmatprep.subr.mxu0 0.0
        %393 = vmatpush2.msra.mxu0 0.0
        %394 = vmatprep.subr.mxu0 0.0
        %395 = vmatpush2.msra.mxu0 0.0
        %396 = vmatprep.subr.mxu0 0.0
        %397 = vmatpush2.msra.mxu0 0.0
        %398 = vmatprep.subr.mxu0 0.0
        %399 = vmatpush2.msra.mxu0 0.0
        %400 = vmatprep.subr.mxu0 0.0
        %401 = vmatpush2.msra.mxu0 0.0
        %402 = vmatprep.subr.mxu0 0.0
        %403 = vmatpush2.msra.mxu0 0.0
        %404 = vmatprep.subr.mxu0 0.0
        %405 = vmatpush2.msra.mxu0 0.0
        %406 = vmatprep.subr.mxu0 0.0
        %407 = vmatpush2.msra.mxu0 0.0
        %408 = vmatprep.mubr.f32.mxu0 0.0
        %409 = vmatmul.mubr.f32.gmra.mxu0 %v271
        %v410 = vpop.f32.mrf.mxu0
        %v411 = vadd.f32 0.0, %v410
        %v412 = vpop.f32.mrf.mxu0
        %413 = vdwg.mxu0
        %v414 = vmax.f32 %v411, 0.0
        %vm415 = vcmask 15360
        %v417 = vsel %vm415, %v268, 0
        %vm419 = vcmask 1041408
        %v421 = vsel %vm419, %v414, 0
        %423 = vmatprep.subr.mxu0 0.0
        %424 = vmatpush1.msra.mxu0 0.0
        %425 = vmatprep.subr.mxu0 0.0
        %426 = vmatpush1.msra.mxu0 0.0
        %427 = vmatprep.subr.mxu0 0.0
        %428 = vmatpush1.msra.mxu0 0.0
        %429 = vmatprep.subr.mxu0 0.0
        %430 = vmatpush1.msra.mxu0 0.0
        %431 = vmatprep.subr.mxu0 0.0
        %432 = vmatpush1.msra.mxu0 0.0
        %433 = vmatprep.subr.mxu0 0.0
        %434 = vmatpush1.msra.mxu0 0.0
        %435 = vmatprep.subr.mxu0 0.0
        %436 = vmatpush1.msra.mxu0 0.0
        %437 = vmatprep.subr.mxu0 0.0
        %438 = vmatpush1.msra.mxu0 0.0
        %439 = vmatprep.subr.mxu0 0.0
        %440 = vmatpush1.msra.mxu0 0.0
        %441 = vmatprep.subr.mxu0 0.0
        %442 = vmatpush1.msra.mxu0 0.0
        %443 = vmatprep.subr.mxu0 0.0
        %444 = vmatpush1.msra.mxu0 0.0
        %445 = vmatprep.subr.mxu0 0.0
        %446 = vmatpush1.msra.mxu0 0.0
        %447 = vmatprep.subr.mxu0 0.0
        %448 = vmatpush1.msra.mxu0 0.0
        %449 = vmatprep.subr.mxu0 0.0
        %450 = vmatpush1.msra.mxu0 0.0
        %451 = vmatprep.subr.mxu0 0.0
        %452 = vmatpush1.msra.mxu0 0.0
        %453 = vmatprep.subr.mxu0 0.0
        %454 = vmatpush1.msra.mxu0 %v421
        %455 = vmatprep.subr.mxu0 0.0
        %456 = vmatpush2.msra.mxu0 0.0
        %457 = vmatprep.subr.mxu0 0.0
        %458 = vmatpush2.msra.mxu0 0.0
        %459 = vmatprep.subr.mxu0 0.0
        %460 = vmatpush2.msra.mxu0 0.0
        %461 = vmatprep.subr.mxu0 0.0
        %462 = vmatpush2.msra.mxu0 0.0
        %463 = vmatprep.subr.mxu0 0.0
        %464 = vmatpush2.msra.mxu0 0.0
        %465 = vmatprep.subr.mxu0 0.0
        %466 = vmatpush2.msra.mxu0 0.0
        %467 = vmatprep.subr.mxu0 0.0
        %468 = vmatpush2.msra.mxu0 0.0
        %469 = vmatprep.subr.mxu0 0.0
        %470 = vmatpush2.msra.mxu0 0.0
        %471 = vmatprep.subr.mxu0 0.0
        %472 = vmatpush2.msra.mxu0 0.0
        %473 = vmatprep.subr.mxu0 0.0
        %474 = vmatpush2.msra.mxu0 0.0
        %475 = vmatprep.subr.mxu0 0.0
        %476 = vmatpush2.msra.mxu0 0.0
        %477 = vmatprep.subr.mxu0 0.0
        %478 = vmatpush2.msra.mxu0 0.0
        %479 = vmatprep.subr.mxu0 0.0
        %480 = vmatpush2.msra.mxu0 0.0
        %481 = vmatprep.subr.mxu0 0.0
        %482 = vmatpush2.msra.mxu0 0.0
        %483 = vmatprep.subr.mxu0 0.0
        %484 = vmatpush2.msra.mxu0 0.0
        %485 = vmatprep.subr.mxu0 0.0
        %486 = vmatpush2.msra.mxu0 0.0
        %487 = vmatprep.mubr.f32.mxu0 0.0
        %488 = vmatmul.mubr.f32.gmra.mxu0 %v417
        %v489 = vpop.f32.mrf.mxu0
        %v490 = vadd.f32 0.0, %v489
        %v491 = vpop.f32.mrf.mxu0
        %492 = vdwg.mxu0
        %v494 = vsel %vm419, %v343, 0
        %496 = vmatprep.subr.mxu0 0.0
        %497 = vmatpush1.msra.mxu0 0.0
        %498 = vmatprep.subr.mxu0 0.0
        %499 = vmatpush1.msra.mxu0 0.0
        %500 = vmatprep.subr.mxu0 0.0
        %501 = vmatpush1.msra.mxu0 0.0
        %502 = vmatprep.subr.mxu0 0.0
        %503 = vmatpush1.msra.mxu0 0.0
        %504 = vmatprep.subr.mxu0 0.0
        %505 = vmatpush1.msra.mxu0 0.0
        %506 = vmatprep.subr.mxu0 0.0
        %507 = vmatpush1.msra.mxu0 0.0
        %508 = vmatprep.subr.mxu0 0.0
        %509 = vmatpush1.msra.mxu0 0.0
        %510 = vmatprep.subr.mxu0 0.0
        %511 = vmatpush1.msra.mxu0 0.0
        %512 = vmatprep.subr.mxu0 0.0
        %513 = vmatpush1.msra.mxu0 0.0
        %514 = vmatprep.subr.mxu0 0.0
        %515 = vmatpush1.msra.mxu0 0.0
        %516 = vmatprep.subr.mxu0 0.0
        %517 = vmatpush1.msra.mxu0 0.0
        %518 = vmatprep.subr.mxu0 0.0
        %519 = vmatpush1.msra.mxu0 0.0
        %520 = vmatprep.subr.mxu0 0.0
        %521 = vmatpush1.msra.mxu0 0.0
        %522 = vmatprep.subr.mxu0 0.0
        %523 = vmatpush1.msra.mxu0 0.0
        %524 = vmatprep.subr.mxu0 0.0
        %525 = vmatpush1.msra.mxu0 0.0
        %526 = vmatprep.subr.mxu0 0.0
        %527 = vmatpush1.msra.mxu0 %v494
        %528 = vmatprep.subr.mxu0 0.0
        %529 = vmatpush2.msra.mxu0 0.0
        %530 = vmatprep.subr.mxu0 0.0
        %531 = vmatpush2.msra.mxu0 0.0
        %532 = vmatprep.subr.mxu0 0.0
        %533 = vmatpush2.msra.mxu0 0.0
        %534 = vmatprep.subr.mxu0 0.0
        %535 = vmatpush2.msra.mxu0 0.0
        %536 = vmatprep.subr.mxu0 0.0
        %537 = vmatpush2.msra.mxu0 0.0
        %538 = vmatprep.subr.mxu0 0.0
        %539 = vmatpush2.msra.mxu0 0.0
        %540 = vmatprep.subr.mxu0 0.0
        %541 = vmatpush2.msra.mxu0 0.0
        %542 = vmatprep.subr.mxu0 0.0
        %543 = vmatpush2.msra.mxu0 0.0
        %544 = vmatprep.subr.mxu0 0.0
        %545 = vmatpush2.msra.mxu0 0.0
        %546 = vmatprep.subr.mxu0 0.0
        %547 = vmatpush2.msra.mxu0 0.0
        %548 = vmatprep.subr.mxu0 0.0
        %549 = vmatpush2.msra.mxu0 0.0
        %550 = vmatprep.subr.mxu0 0.0
        %551 = vmatpush2.msra.mxu0 0.0
        %552 = vmatprep.subr.mxu0 0.0
        %553 = vmatpush2.msra.mxu0 0.0
        %554 = vmatprep.subr.mxu0 0.0
        %555 = vmatpush2.msra.mxu0 0.0
        %556 = vmatprep.subr.mxu0 0.0
        %557 = vmatpush2.msra.mxu0 0.0
        %558 = vmatprep.subr.mxu0 0.0
        %559 = vmatpush2.msra.mxu0 0.0
        %560 = vmatprep.mubr.f32.mxu0 0.0
        %561 = vmatmul.mubr.f32.gmra.mxu0 %v417
        %v562 = vpop.f32.mrf.mxu0
        %v563 = vadd.f32 %v490, %v562
        %v564 = vpop.f32.mrf.mxu0
        %565 = vdwg.mxu0
        %v566 = vxor.u32 %v563, 2147483648
        %v567 = vmul.f32 %v566, 1.442695
        %v568 = vpow.pop %v567
        %v569 = vadd.f32 %v568, 1.0
        %v570 = vrcp.pop %v569
        %v571 = vmul.f32 1.0, %v570
        %573 = vset.pattern.permute.xlu0 0
        %574 = vperm.xlu0 %573, %v571
        %v575 = vpop.permute.xlu0 %574
        %v577 = vmul.f32 %v257, %v575
        %v578 = vmul.f32 %v258, %v575
        %v579 = vrot.slane %v577, 4
        %v580 = vadd.f32 %v577, %v579
        %v581 = vrot.slane %v580, 2
        %v582 = vadd.f32 %v580, %v581
        %v583 = vrot.slane %v582, 1
        %v584 = vadd.f32 %v582, %v583
        %v585 = vrot.slane %v578, 4
        %v586 = vadd.f32 %v578, %v585
        %v587 = vrot.slane %v586, 2
        %v588 = vadd.f32 %v586, %v587
        %v589 = vrot.slane %v588, 1
        %v590 = vadd.f32 %v588, %v589
        %v591 = vrcp.pop 8.0
        %v592 = vmul.f32 %v584, %v591
        %v593 = vmul.f32 %v590, %v591
        %v594 = vrot.slane %v577, 4
        %v595 = vmax.f32 %v577, %v594
        %v596 = vrot.slane %v595, 2
        %v597 = vmax.f32 %v595, %v596
        %v598 = vrot.slane %v597, 1
        %v599 = vmax.f32 %v597, %v598
        %v600 = vrot.slane %v578, 4
        %v601 = vmax.f32 %v578, %v600
        %v602 = vrot.slane %v601, 2
        %v603 = vmax.f32 %v601, %v602
        %v604 = vrot.slane %v603, 1
        %v605 = vmax.f32 %v603, %v604
        %vm606 = vcmask 1040384
        %v607 = vsel %vm606, %v592, %v599
        %v608 = vsel %vm606, %v593, %v605
        %609 = vst [vmem:[#allocation2] sm:$0xff] 0.0
        %610 = vst [vmem:[#allocation2 + $0x8] sm:$0xff] 0.0
        %611 = vst [vmem:[#allocation2 + $0x10] sm:$0xff] 0.0
        %612 = vst [vmem:[#allocation2 + $0x18] sm:$0xff] 0.0
        %613 = vrot.lane.b32.xlu0 %v607, 48
        %v614 = vpop.permute.xlu0 %613
        %615 = vrot.lane.b32.xlu0 %v608, 48
        %v616 = vpop.permute.xlu0 %615
        %v617 = vlaneseq
        %v618 = vand.u32 %v617, 127
        %vm619 = vcmp.lt.s32.totalorder %v618, 48
        %v620 = vsel %vm619, %v614, %v616
        %v621 = vsel %vm619, %v616, %v614
        %622 = vst [vmem:[#allocation2] sm:$0x3] %v621
        %623 = vst [vmem:[#allocation2 + $0x8] sm:$0x3] %v620
        %624 = vrot.lane.b32.xlu0 %v607, 32
        %v625 = vpop.permute.xlu0 %624
        %626 = vrot.lane.b32.xlu0 %v608, 32
        %v627 = vpop.permute.xlu0 %626
        %vm628 = vcmp.lt.s32.totalorder %v618, 32
        %v629 = vsel %vm628, %v625, %v627
        %v630 = vsel %vm628, %v627, %v625
        %v633 = vrot.slane %v630, 6
        %v634 = vrot.slane %v629, 6
        %637 = vst [vmem:[#allocation2] sm:$0xc] %v633
        %638 = vst [vmem:[#allocation2 + $0x8] sm:$0xc] %v634
        %639 = vrot.lane.b32.xlu0 %v607, 16
        %v640 = vpop.permute.xlu0 %639
        %641 = vrot.lane.b32.xlu0 %v608, 16
        %v642 = vpop.permute.xlu0 %641
        %vm643 = vcmp.lt.s32.totalorder %v618, 16
        %v644 = vsel %vm643, %v640, %v642
        %v645 = vsel %vm643, %v642, %v640
        %v648 = vrot.slane %v645, 4
        %v649 = vrot.slane %v644, 4
        %652 = vst [vmem:[#allocation2] sm:$0x30] %v648
        %653 = vst [vmem:[#allocation2 + $0x8] sm:$0x30] %v649
        %v656 = vrot.slane %v607, 2
        %v657 = vrot.slane %v608, 2
        %660 = vst [vmem:[#allocation2] sm:$0xc0] %v656
        %661 = vst [vmem:[#allocation2 + $0x8] sm:$0xc0] %v657
        %662 = vrot.lane.b32.xlu0 %v607, 112
        %v663 = vpop.permute.xlu0 %662
        %664 = vrot.lane.b32.xlu0 %v608, 112
        %v665 = vpop.permute.xlu0 %664
        %vm666 = vcmp.lt.s32.totalorder %v618, 112
        %v667 = vsel %vm666, %v663, %v665
        %v668 = vsel %vm666, %v665, %v663
        %669 = vst [vmem:[#allocation2 + $0x10] sm:$0x3] %v667
        %670 = vst [vmem:[#allocation2 + $0x18] sm:$0x3] %v668
        %671 = vrot.lane.b32.xlu0 %v607, 96
        %v672 = vpop.permute.xlu0 %671
        %673 = vrot.lane.b32.xlu0 %v608, 96
        %v674 = vpop.permute.xlu0 %673
        %vm675 = vcmp.lt.s32.totalorder %v618, 96
        %v676 = vsel %vm675, %v672, %v674
        %v677 = vsel %vm675, %v674, %v672
        %v680 = vrot.slane %v676, 6
        %v681 = vrot.slane %v677, 6
        %684 = vst [vmem:[#allocation2 + $0x10] sm:$0xc] %v680
        %685 = vst [vmem:[#allocation2 + $0x18] sm:$0xc] %v681
        %686 = vrot.lane.b32.xlu0 %v607, 80
        %v687 = vpop.permute.xlu0 %686
        %688 = vrot.lane.b32.xlu0 %v608, 80
        %v689 = vpop.permute.xlu0 %688
        %vm690 = vcmp.lt.s32.totalorder %v618, 80
        %v691 = vsel %vm690, %v687, %v689
        %v692 = vsel %vm690, %v689, %v687
        %v695 = vrot.slane %v691, 4
        %v696 = vrot.slane %v692, 4
        %699 = vst [vmem:[#allocation2 + $0x10] sm:$0x30] %v695
        %700 = vst [vmem:[#allocation2 + $0x18] sm:$0x30] %v696
        %v701 = vld [vmem:[#allocation2] sm:$0xff]
        %v702 = vld [vmem:[#allocation2 + $0x8] sm:$0xff]
        %v703 = vld [vmem:[#allocation2 + $0x10] sm:$0xff]
        %v704 = vld [vmem:[#allocation2 + $0x18] sm:$0xff]
        %705 = vrot.lane.b32.xlu0 %v701, 3
        %v706 = vpop.permute.xlu0 %705
        %707 = vrot.lane.b32.xlu0 %v703, 3
        %v708 = vpop.permute.xlu0 %707
        %709 = vrot.lane.b32.xlu0 %v702, 3
        %v710 = vpop.permute.xlu0 %709
        %711 = vrot.lane.b32.xlu0 %v704, 3
        %v712 = vpop.permute.xlu0 %711
        %vm713 = vcmp.lt.s32.totalorder %v618, 3
        %v714 = vsel %vm713, %v706, %v710
        %v715 = vsel %vm713, %v708, %v712
        %v716 = vsel %vm713, %v710, %v706
        %v717 = vsel %vm713, %v712, %v708
        %v718 = vld [vmem:[#allocation7] sm:$0xff]
        %v719 = vld [vmem:[#allocation7 + $0x8] sm:$0xff]
        %v720 = vld [vmem:[#allocation7 + $0x10] sm:$0xff]
        %v721 = vld [vmem:[#allocation7 + $0x18] sm:$0xff]
        %v722 = vmul.f32 %v716, %v718
        %v723 = vmul.f32 %v714, %v719
        %v724 = vmul.f32 %v717, %v720
        %v725 = vmul.f32 %v715, %v721
        %v726 = vadd.f32 %v722, 0.0
        %v727 = vadd.f32 %v723, 0.0
        %v728 = vadd.f32 %v724, 0.0
        %v729 = vadd.f32 %v725, 0.0
        %730 = vrot.lane.b32.xlu0 %v701, 2
        %v731 = vpop.permute.xlu0 %730
        %732 = vrot.lane.b32.xlu0 %v703, 2
        %v733 = vpop.permute.xlu0 %732
        %734 = vrot.lane.b32.xlu0 %v702, 2
        %v735 = vpop.permute.xlu0 %734
        %736 = vrot.lane.b32.xlu0 %v704, 2
        %v737 = vpop.permute.xlu0 %736
        %vm738 = vcmp.lt.s32.totalorder %v618, 2
        %v739 = vsel %vm738, %v731, %v735
        %v740 = vsel %vm738, %v733, %v737
        %v741 = vsel %vm738, %v735, %v731
        %v742 = vsel %vm738, %v737, %v733
        %s743 = scalar_lea.vmem [#allocation7], 32
        %v744 = vld [vmem:[%s743] sm:$0xff]
        %v745 = vld [vmem:[%s743 + $0x8] sm:$0xff]
        %v746 = vld [vmem:[%s743 + $0x10] sm:$0xff]
        %v747 = vld [vmem:[%s743 + $0x18] sm:$0xff]
        %v748 = vmul.f32 %v741, %v744
        %v749 = vmul.f32 %v739, %v745
        %v750 = vmul.f32 %v742, %v746
        %v751 = vmul.f32 %v740, %v747
        %v752 = vadd.f32 %v726, %v748
        %v753 = vadd.f32 %v727, %v749
        %v754 = vadd.f32 %v728, %v750
        %v755 = vadd.f32 %v729, %v751
        %756 = vrot.lane.b32.xlu0 %v701, 1
        %v757 = vpop.permute.xlu0 %756
        %758 = vrot.lane.b32.xlu0 %v703, 1
        %v759 = vpop.permute.xlu0 %758
        %760 = vrot.lane.b32.xlu0 %v702, 1
        %v761 = vpop.permute.xlu0 %760
        %762 = vrot.lane.b32.xlu0 %v704, 1
        %v763 = vpop.permute.xlu0 %762
        %vm764 = vcmp.lt.s32.totalorder %v618, 1
        %v765 = vsel %vm764, %v757, %v761
        %v766 = vsel %vm764, %v759, %v763
        %v767 = vsel %vm764, %v761, %v757
        %v768 = vsel %vm764, %v763, %v759
        %s769 = scalar_lea.vmem [#allocation7], 64
        %v770 = vld [vmem:[%s769] sm:$0xff]
        %v771 = vld [vmem:[%s769 + $0x8] sm:$0xff]
        %v772 = vld [vmem:[%s769 + $0x10] sm:$0xff]
        %v773 = vld [vmem:[%s769 + $0x18] sm:$0xff]
        %v774 = vmul.f32 %v767, %v770
        %v775 = vmul.f32 %v765, %v771
        %v776 = vmul.f32 %v768, %v772
        %v777 = vmul.f32 %v766, %v773
        %v778 = vadd.f32 %v752, %v774
        %v779 = vadd.f32 %v753, %v775
        %v780 = vadd.f32 %v754, %v776
        %v781 = vadd.f32 %v755, %v777
        %s782 = scalar_lea.vmem [#allocation7], 96
        %v783 = vld [vmem:[%s782] sm:$0xff]
        %v784 = vld [vmem:[%s782 + $0x8] sm:$0xff]
        %v785 = vld [vmem:[%s782 + $0x10] sm:$0xff]
        %v786 = vld [vmem:[%s782 + $0x18] sm:$0xff]
        %v787 = vmul.f32 %v701, %v783
        %v788 = vmul.f32 %v702, %v784
        %v789 = vmul.f32 %v703, %v785
        %v790 = vmul.f32 %v704, %v786
        %v791 = vadd.f32 %v778, %v787
        %v792 = vadd.f32 %v779, %v788
        %v793 = vadd.f32 %v780, %v789
        %v794 = vadd.f32 %v781, %v790
        %795 = vrot.lane.b32.xlu0 %v701, 127
        %v796 = vpop.permute.xlu0 %795
        %797 = vrot.lane.b32.xlu0 %v703, 127
        %v798 = vpop.permute.xlu0 %797
        %799 = vrot.lane.b32.xlu0 %v702, 127
        %v800 = vpop.permute.xlu0 %799
        %801 = vrot.lane.b32.xlu0 %v704, 127
        %v802 = vpop.permute.xlu0 %801
        %vm803 = vcmp.lt.s32.totalorder %v618, 127
        %v804 = vsel %vm803, %v796, %v800
        %v805 = vsel %vm803, %v798, %v802
        %v806 = vsel %vm803, %v800, %v796
        %v807 = vsel %vm803, %v802, %v798
        %s808 = scalar_lea.vmem [#allocation7], 128
        %v809 = vld [vmem:[%s808] sm:$0xff]
        %v810 = vld [vmem:[%s808 + $0x8] sm:$0xff]
        %v811 = vld [vmem:[%s808 + $0x10] sm:$0xff]
        %v812 = vld [vmem:[%s808 + $0x18] sm:$0xff]
        %v813 = vmul.f32 %v804, %v809
        %v814 = vmul.f32 %v806, %v810
        %v815 = vmul.f32 %v805, %v811
        %v816 = vmul.f32 %v807, %v812
        %v817 = vadd.f32 %v791, %v813
        %v818 = vadd.f32 %v792, %v814
        %v819 = vadd.f32 %v793, %v815
        %v820 = vadd.f32 %v794, %v816
        %821 = vrot.lane.b32.xlu0 %v701, 126
        %v822 = vpop.permute.xlu0 %821
        %823 = vrot.lane.b32.xlu0 %v703, 126
        %v824 = vpop.permute.xlu0 %823
        %825 = vrot.lane.b32.xlu0 %v702, 126
        %v826 = vpop.permute.xlu0 %825
        %827 = vrot.lane.b32.xlu0 %v704, 126
        %v828 = vpop.permute.xlu0 %827
        %vm829 = vcmp.lt.s32.totalorder %v618, 126
        %v830 = vsel %vm829, %v822, %v826
        %v831 = vsel %vm829, %v824, %v828
        %v832 = vsel %vm829, %v826, %v822
        %v833 = vsel %vm829, %v828, %v824
        %s834 = scalar_lea.vmem [#allocation7], 160
        %v835 = vld [vmem:[%s834] sm:$0xff]
        %v836 = vld [vmem:[%s834 + $0x8] sm:$0xff]
        %v837 = vld [vmem:[%s834 + $0x10] sm:$0xff]
        %v838 = vld [vmem:[%s834 + $0x18] sm:$0xff]
        %v839 = vmul.f32 %v830, %v835
        %v840 = vmul.f32 %v832, %v836
        %v841 = vmul.f32 %v831, %v837
        %v842 = vmul.f32 %v833, %v838
        %v843 = vadd.f32 %v817, %v839
        %v844 = vadd.f32 %v818, %v840
        %v845 = vadd.f32 %v819, %v841
        %v846 = vadd.f32 %v820, %v842
        %847 = vrot.lane.b32.xlu0 %v701, 125
        %v848 = vpop.permute.xlu0 %847
        %849 = vrot.lane.b32.xlu0 %v703, 125
        %v850 = vpop.permute.xlu0 %849
        %851 = vrot.lane.b32.xlu0 %v702, 125
        %v852 = vpop.permute.xlu0 %851
        %853 = vrot.lane.b32.xlu0 %v704, 125
        %v854 = vpop.permute.xlu0 %853
        %vm855 = vcmp.lt.s32.totalorder %v618, 125
        %v856 = vsel %vm855, %v848, %v852
        %v857 = vsel %vm855, %v850, %v854
        %v858 = vsel %vm855, %v852, %v848
        %v859 = vsel %vm855, %v854, %v850
        %s860 = scalar_lea.vmem [#allocation7], 192
        %v861 = vld [vmem:[%s860] sm:$0xff]
        %v862 = vld [vmem:[%s860 + $0x8] sm:$0xff]
        %v863 = vld [vmem:[%s860 + $0x10] sm:$0xff]
        %v864 = vld [vmem:[%s860 + $0x18] sm:$0xff]
        %v865 = vmul.f32 %v856, %v861
        %v866 = vmul.f32 %v858, %v862
        %v867 = vmul.f32 %v857, %v863
        %v868 = vmul.f32 %v859, %v864
        %v869 = vadd.f32 %v843, %v865
        %v870 = vadd.f32 %v844, %v866
        %v871 = vadd.f32 %v845, %v867
        %v872 = vadd.f32 %v846, %v868
        %v873 = vadd.f32 %v869, %v871
        %v874 = vrot.slane %v873, 4
        %v875 = vadd.f32 %v873, %v874
        %v876 = vrot.slane %v875, 2
        %v877 = vadd.f32 %v875, %v876
        %v878 = vrot.slane %v877, 1
        %v879 = vadd.f32 %v877, %v878
        %v880 = vadd.f32 %v870, %v872
        %v881 = vrot.slane %v880, 4
        %v882 = vadd.f32 %v880, %v881
        %v883 = vrot.slane %v882, 2
        %v884 = vadd.f32 %v882, %v883
        %v885 = vrot.slane %v884, 1
        %v886 = vadd.f32 %v884, %v885
        %s887 = sld [smem:[#allocation3]]
        %v888 = vstv %s887
        %v889 = vadd.f32 %v879, %v888
        %v890 = vadd.f32 %v886, %v888
        %v891 = vxor.u32 %v889, 2147483648
        %v892 = vxor.u32 %v890, 2147483648
        %v893 = vmul.f32 %v891, 1.442695
        %v894 = vpow.pop %v893
        %v895 = vmul.f32 %v892, 1.442695
        %v896 = vpow.pop %v895
        %v897 = vadd.f32 %v894, 1.0
        %v898 = vadd.f32 %v896, 1.0
        %v899 = vrcp.pop %v897
        %v900 = vmul.f32 1.0, %v899
        %v901 = vrcp.pop %v898
        %v902 = vmul.f32 1.0, %v901
        %v903 = vmul.f32 %v577, %v900
        %v904 = vmul.f32 %v578, %v902
        %v905 = vmul.f32 %v903, %v577
        %v906 = vmul.f32 %v904, %v578
        %907 = vst [vmem:[%s256] sm:$0xff] %v905
        %908 = vst [vmem:[%s256 + $0x8] sm:$0xff] %v906
        %s909 = sand.u32 %s142, 1
        %s910 = scalar_lea.sflag [#allocation6], %s909
        %s911 = sand.u32 %s142, 1
        %s912 = smul.addr %s911, 16
        %s913 = scalar_lea.vmem [#allocation9], %s912
        // Predicated region
        $region49: #{tpu_custom_call.1} parent=39 // pred_check
          %p914 = pneg %p152
        $region50: #{tpu_custom_call.1} parent=39 // pred_check_branch
          %916 = sbr.rel (%p914) target = $region52
        $region51: #{tpu_custom_call.1} parent=39 // pred_region
          %s918 = ssub.s32 256, 256
          %919 = vsyncadd %s910, %s918
          %s920 = smul.addr %s24, 2
          %s921 = smul.addr %s920, 128
          %s922 = scalar_lea.hbm %s5, %s921
          %s924 = sshll.u32 %s913, 4
          %s925 = int_to_ptr.vmem [resolvable:$true] %s924
          %927 = dma.vmem_to_hbm [thread:$0]  %s925, 256, %s922, %s910
        $region52: #{tpu_custom_call.1} parent=39 // pred_fallthru
          _
      $region40: #{tpu_custom_call.1} parent=5 // pred_fallthru
        _
      %p928 = scmp.le.s32.totalorder 2, %s19
      // Predicated region
      $region53: #{tpu_custom_call.1} parent=5 // pred_check
        %p929 = pneg %p928
      $region54: #{tpu_custom_call.1} parent=5 // pred_check_branch
        %931 = sbr.rel (%p929) target = $region56
      $region55: #{tpu_custom_call.1} parent=5 // pred_region
        %s932 = ssub.s32 %s19, 2
        // Predicated region
        $region57: #{tpu_custom_call.1} parent=55 // pred_check
          %p933 = pneg %p158
        $region58: #{tpu_custom_call.1} parent=55 // pred_check_branch
          %935 = sbr.rel (%p933) target = $region60
        $region59: #{tpu_custom_call.1} parent=55 // pred_region
          %s936 = sand.u32 %s143, 1
          %s937 = scalar_lea.sflag [#allocation6], %s936
          %s938 = sand.u32 %s143, 1
          %s939 = smul.addr %s938, 16
          %s940 = scalar_lea.vmem [#allocation9], %s939
          %941 = dma.done %s937, 256
        $region60: #{tpu_custom_call.1} parent=55 // pred_fallthru
          _
      $region56: #{tpu_custom_call.1} parent=5 // pred_fallthru
        _
    $region6: #{tpu_custom_call.1} parent=1 // loop_footer
      %s23 = sadd.s32 1, %s19
    $region7: #{tpu_custom_call.1} parent=1 // loop_footer_branch
      %18 = sbr.rel target = $region3
    $region8: #{tpu_custom_call.1} parent=1 // loop_exit
      _
    %942 = vsyncpa [#allocation5], 1
    %s943 = scalar_lea.sflag [#allocation5], 1
    %944 = vsyncpa %s943, 1
    %945 = vsyncpa [#allocation8], 1
    %946 = vsyncpa [#allocation6], 1
    %s947 = scalar_lea.sflag [#allocation6], 1
    %948 = vsyncpa %s947, 1

</llo_original>
